<compile_context>
chip_gen: v5e
topology: v5e:2x2
jax: 0.10.0
libtpu: 0.0.40
codegen_flags: <defaults>
</compile_context>

<pallas_src>
import jax
import jax.numpy as jnp
from jax.experimental import pallas as pl
from jax.experimental.pallas import tpu as pltpu

INPUT_SIZE = 6
HIDDEN_SIZE = 64
OUTPUT_SIZE = 6

IN_PAD = 8    # contraction dim 6 -> 8 (sublane multiple; zero rows contribute 0)
OUT_PAD = 8   # output rows 6 -> 8 so output vregs/stores are fully unmasked

LANE = 128
# Max lanes per grid step.  96*block_b bytes double-buffered => ~6.3 MiB at 64K lanes,
# under the default scoped-VMEM limit on every generation (raise vmem_limit_bytes only
# if you push past ~128K lanes on v7x).
DEFAULT_MAX_BLOCK_B = 65536


def mlp_kernel(xt_ref, w1_ref, b1_ref, w2_ref, b2_ref, o_ref):
    # xt_ref: (IN_PAD, TB)      bf16  -- batch on lanes (lane-dense loads)
    # w1_ref: (HIDDEN, IN_PAD)  bf16  -- PyTorch (out,in) layout, zero-padded, VMEM-resident
    # b1_ref: (HIDDEN, 1)       f32
    # w2_ref: (OUT_PAD, HIDDEN) bf16
    # b2_ref: (OUT_PAD, 1)      f32
    # o_ref : (OUT_PAD, TB)     out dtype -- lane-dense stores
    h = jnp.dot(w1_ref[...], xt_ref[...], preferred_element_type=jnp.float32)
    h = jnp.maximum(h + b1_ref[...], 0.0)                       # bias + ReLU in f32
    # Hidden activations rounded to bf16 before the second MXU dot (documented; the
    # correctness reference below applies the same rounding).
    y = jnp.dot(w2_ref[...], h.astype(w2_ref.dtype),
                preferred_element_type=jnp.float32)
    o_ref[...] = (y + b2_ref[...]).astype(o_ref.dtype)


def _round_up(n, m):
    return ((n + m - 1) // m) * m


def _choose_block_b(B, max_block_b):
    # Aim for >= 4 grid steps (>= 2 guarantees work for the second TensorCore on v7x),
    # never below one 128-lane tile, never above max_block_b, always lane-aligned.
    target_steps = 4
    per_step = -(-B // target_steps)
    return max(LANE, min(max_block_b, _round_up(per_step, LANE)))


def prepare_params(w1, b1, w2, b2, compute_dtype=jnp.bfloat16):
    """Pad / cast PyTorch-layout params once (w1 (64,6), b1 (64,), w2 (6,64), b2 (6,))."""
    w1p = jnp.zeros((HIDDEN_SIZE, IN_PAD), compute_dtype)
    w1p = w1p.at[:, :INPUT_SIZE].set(w1.astype(compute_dtype))
    b1p = b1.reshape(HIDDEN_SIZE, 1).astype(jnp.float32)
    w2p = jnp.zeros((OUT_PAD, HIDDEN_SIZE), compute_dtype)
    w2p = w2p.at[:OUTPUT_SIZE, :].set(w2.astype(compute_dtype))
    b2p = jnp.zeros((OUT_PAD, 1), jnp.float32)
    b2p = b2p.at[:OUTPUT_SIZE, 0].set(b2.astype(jnp.float32))
    return w1p, b1p, w2p, b2p


def multi_agent_model_forward_t(xt, w1p, b1p, w2p, b2p, *, block_b,
                                out_dtype=jnp.float32):
    """Fast path: features-major operands, no wrapper layout passes.
    xt: (IN_PAD, B_pad) compute-dtype with B_pad a multiple of block_b.
    Returns (OUT_PAD, B_pad) in out_dtype."""
    in_pad, B_pad = xt.shape
    assert in_pad == IN_PAD
    assert block_b % LANE == 0 and B_pad % block_b == 0
    n_blocks = B_pad // block_b

    return pl.pallas_call(
        mlp_kernel,
        out_shape=jax.ShapeDtypeStruct((OUT_PAD, B_pad), out_dtype),
        grid=(n_blocks,),
        in_specs=[
            pl.BlockSpec((IN_PAD, block_b), lambda i: (0, i)),       # stream x tiles
            pl.BlockSpec((HIDDEN_SIZE, IN_PAD), lambda i: (0, 0)),   # weights resident
            pl.BlockSpec((HIDDEN_SIZE, 1), lambda i: (0, 0)),
            pl.BlockSpec((OUT_PAD, HIDDEN_SIZE), lambda i: (0, 0)),
            pl.BlockSpec((OUT_PAD, 1), lambda i: (0, 0)),
        ],
        out_specs=pl.BlockSpec((OUT_PAD, block_b), lambda i: (0, i)),
        compiler_params=pltpu.CompilerParams(
            dimension_semantics=("parallel",),   # batch tiles split across TCs on v7x
        ),
    )(xt, w1p, b1p, w2p, b2p)


def multi_agent_model_forward(x, w1, b1, w2, b2, *, block_b=None,
                              max_block_b=DEFAULT_MAX_BLOCK_B,
                              compute_dtype=jnp.bfloat16, out_dtype=jnp.float32):
    """PyTorch-layout API.  x: (B, 6) f32; params in torch layouts.  Returns (B, 6)."""
    B = x.shape[0]
    if block_b is None:
        block_b = _choose_block_b(B, max_block_b)
    assert block_b % LANE == 0, "batch tile must be lane-aligned (multiple of 128)"
    n_blocks = -(-B // block_b)
    B_pad = n_blocks * block_b

    # One fused cast + transpose + pad pass (batch onto the lane axis).
    # TODO(synk): hot-loop callers should feed features-major (6, B) data straight into
    # multi_agent_model_forward_t to skip this pass and the final slice+transpose.
    xt = jnp.pad(x.astype(compute_dtype).T,
                 ((0, IN_PAD - INPUT_SIZE), (0, B_pad - B)))

    w1p, b1p, w2p, b2p = prepare_params(w1, b1, w2, b2, compute_dtype)
    out_t = multi_agent_model_forward_t(xt, w1p, b1p, w2p, b2p,
                                        block_b=block_b, out_dtype=out_dtype)
    # Drop padding, return in PyTorch (B, OUT) layout.
    return out_t[:OUTPUT_SIZE, :B].T


def init_params(key):
    """nn.Linear-style uniform(-1/sqrt(fan_in), 1/sqrt(fan_in)) init, torch layouts."""
    k1, k2, k3, k4 = jax.random.split(key, 4)
    bound1 = 1.0 / jnp.sqrt(INPUT_SIZE)
    bound2 = 1.0 / jnp.sqrt(HIDDEN_SIZE)
    w1 = jax.random.uniform(k1, (HIDDEN_SIZE, INPUT_SIZE), jnp.float32, -bound1, bound1)
    b1 = jax.random.uniform(k2, (HIDDEN_SIZE,), jnp.float32, -bound1, bound1)
    w2 = jax.random.uniform(k3, (OUTPUT_SIZE, HIDDEN_SIZE), jnp.float32, -bound2, bound2)
    b2 = jax.random.uniform(k4, (OUTPUT_SIZE,), jnp.float32, -bound2, bound2)
    return w1, b1, w2, b2


if __name__ == "__main__":
    key = jax.random.PRNGKey(0)
    k_params, k_x = jax.random.split(key)
    w1, b1, w2, b2 = init_params(k_params)

    batch = 200  # non-multiple of 128 -> exercises batch padding and a 2-step grid
    x = jax.random.normal(k_x, (batch, INPUT_SIZE), dtype=jnp.float32)

    out = multi_agent_model_forward(x, w1, b1, w2, b2)
    out = jax.block_until_ready(out)
    assert out.shape == (batch, OUTPUT_SIZE)
    assert out.dtype == jnp.float32

    # Reference mirrors the kernel arithmetic exactly (bf16 operands, f32 accumulation,
    # bf16-rounded hidden activations), so the comparison is tight.
    xr = x.astype(jnp.bfloat16).astype(jnp.float32)
    w1r = w1.astype(jnp.bfloat16).astype(jnp.float32)
    w2r = w2.astype(jnp.bfloat16).astype(jnp.float32)
    h_ref = jnp.maximum(xr @ w1r.T + b1, 0.0).astype(jnp.bfloat16).astype(jnp.float32)
    ref = h_ref @ w2r.T + b2
    max_err = float(jnp.max(jnp.abs(out - ref)))
    assert jnp.allclose(out, ref, atol=1e-2, rtol=1e-2), max_err

    print("KERNEL_OK")
</pallas_src>

<mosaic_0001>
module attributes {stable_mosaic.version = 11 : i64} {
  func.func @mlp_kernel(%arg0: i32, %arg1: memref<8x128xbf16, #tpu.memory_space<vmem>>, %arg2: memref<64x8xbf16, #tpu.memory_space<vmem>>, %arg3: memref<64x1xf32, #tpu.memory_space<vmem>>, %arg4: memref<8x64xbf16, #tpu.memory_space<vmem>>, %arg5: memref<8x1xf32, #tpu.memory_space<vmem>>, %arg6: memref<8x128xf32, #tpu.memory_space<vmem>>) attributes {dimension_semantics = [#tpu.dimension_semantics<parallel>], iteration_bounds = array<i64: 2>, scalar_prefetch = 0 : i64, scratch_operands = 0 : i64, tpu.core_type = #tpu.core_type<tc>, window_params = [{transform_indices = @transform_0, window_bounds = array<i64: 8, 128>}, {pipeline_mode = #tpu.pipeline_mode<synchronous>, transform_indices = @transform_1, window_bounds = array<i64: 64, 8>}, {pipeline_mode = #tpu.pipeline_mode<synchronous>, transform_indices = @transform_2, window_bounds = array<i64: 64, 1>}, {pipeline_mode = #tpu.pipeline_mode<synchronous>, transform_indices = @transform_3, window_bounds = array<i64: 8, 64>}, {pipeline_mode = #tpu.pipeline_mode<synchronous>, transform_indices = @transform_4, window_bounds = array<i64: 8, 1>}, {transform_indices = @transform_5, window_bounds = array<i64: 8, 128>}]} {
    %c0 = arith.constant 0 : index
    %c0_0 = arith.constant 0 : index
    %0 = vector.load %arg2[%c0, %c0_0] : memref<64x8xbf16, #tpu.memory_space<vmem>>, vector<64x8xbf16>
    %c0_1 = arith.constant 0 : index
    %c0_2 = arith.constant 0 : index
    %1 = vector.load %arg1[%c0_1, %c0_2] : memref<8x128xbf16, #tpu.memory_space<vmem>>, vector<8x128xbf16>
    %cst = arith.constant dense<0.000000e+00> : vector<64x128xf32>
    %2 = tpu.matmul %0, %1, %cst {dimension_numbers = #tpu.dot_dimension_numbers<[1], [0], [0], [1], [0, 0, 1, 1], [], []>} : vector<64x8xbf16>, vector<8x128xbf16>, vector<64x128xf32> -> vector<64x128xf32>
    %c0_3 = arith.constant 0 : index
    %c0_4 = arith.constant 0 : index
    %3 = vector.load %arg3[%c0_3, %c0_4] : memref<64x1xf32, #tpu.memory_space<vmem>>, vector<64x1xf32>
    %4 = vector.broadcast %3 : vector<64x1xf32> to vector<64x128xf32>
    %5 = arith.addf %2, %4 : vector<64x128xf32>
    %cst_5 = arith.constant 0.000000e+00 : f32
    %6 = vector.broadcast %cst_5 : f32 to vector<64x128xf32>
    %7 = arith.maximumf %5, %6 : vector<64x128xf32>
    %c0_6 = arith.constant 0 : index
    %c0_7 = arith.constant 0 : index
    %8 = vector.load %arg4[%c0_6, %c0_7] : memref<8x64xbf16, #tpu.memory_space<vmem>>, vector<8x64xbf16>
    %9 = arith.truncf %7 : vector<64x128xf32> to vector<64x128xbf16>
    %cst_8 = arith.constant dense<0.000000e+00> : vector<8x128xf32>
    %10 = tpu.matmul %8, %9, %cst_8 {dimension_numbers = #tpu.dot_dimension_numbers<[1], [0], [0], [1], [0, 0, 1, 1], [], []>} : vector<8x64xbf16>, vector<64x128xbf16>, vector<8x128xf32> -> vector<8x128xf32>
    %c0_9 = arith.constant 0 : index
    %c0_10 = arith.constant 0 : index
    %11 = vector.load %arg5[%c0_9, %c0_10] : memref<8x1xf32, #tpu.memory_space<vmem>>, vector<8x1xf32>
    %12 = vector.broadcast %11 : vector<8x1xf32> to vector<8x128xf32>
    %13 = arith.addf %10, %12 : vector<8x128xf32>
    %c0_11 = arith.constant 0 : index
    %c0_12 = arith.constant 0 : index
    %14 = vector.load %arg6[%c0_11, %c0_12] : memref<8x128xf32, #tpu.memory_space<vmem>>, vector<8x128xf32>
    tpu.vector_store %arg6[%c0_11, %c0_12], %13 {strides = array<i32>} : memref<8x128xf32, #tpu.memory_space<vmem>>, vector<8x128xf32>,
    return
  }
  func.func @transform_0(%arg0: i32) -> (i32, i32) {
    %c0_i32 = arith.constant 0 : i32
    %c0_i32_0 = arith.constant 0 : i32
    return %c0_i32, %arg0 : i32, i32
  }
  func.func @transform_1(%arg0: i32) -> (i32, i32) {
    %c0_i32 = arith.constant 0 : i32
    %c0_i32_0 = arith.constant 0 : i32
    %c0_i32_1 = arith.constant 0 : i32
    return %c0_i32, %c0_i32_0 : i32, i32
  }
  func.func @transform_2(%arg0: i32) -> (i32, i32) {
    %c0_i32 = arith.constant 0 : i32
    %c0_i32_0 = arith.constant 0 : i32
    %c0_i32_1 = arith.constant 0 : i32
    return %c0_i32, %c0_i32_0 : i32, i32
  }
  func.func @transform_3(%arg0: i32) -> (i32, i32) {
    %c0_i32 = arith.constant 0 : i32
    %c0_i32_0 = arith.constant 0 : i32
    %c0_i32_1 = arith.constant 0 : i32
    return %c0_i32, %c0_i32_0 : i32, i32
  }
  func.func @transform_4(%arg0: i32) -> (i32, i32) {
    %c0_i32 = arith.constant 0 : i32
    %c0_i32_0 = arith.constant 0 : i32
    %c0_i32_1 = arith.constant 0 : i32
    return %c0_i32, %c0_i32_0 : i32, i32
  }
  func.func @transform_5(%arg0: i32) -> (i32, i32) {
    %c0_i32 = arith.constant 0 : i32
    %c0_i32_0 = arith.constant 0 : i32
    return %c0_i32, %arg0 : i32, i32
  }
}

</mosaic_0001>

<llo_original>
// kernel: tpu_custom_call.1
$region0: #{tpu_custom_call.1}
  #allocation0 [shape = 'u32[]', space=smem, size = 0x4, offset = 0x4, fixed_abs, tag = 'smem constant byte address 0x4 - core index']
  #allocation1 [shape = 'u32[72,128]{1,0:T(1,128)}', space=vmem, size = 0x9000, scoped, tag = 'internal scratch']
  %s0 = inlined_call_operand.vmem [shape: bf16[8,256], index: 0, kind: input, shape index: {}]
  %s1 = inlined_call_operand.vmem [shape: bf16[64,8], index: 1, kind: input, shape index: {}]
  %s2 = inlined_call_operand.vmem [shape: f32[64,1], index: 2, kind: input, shape index: {}]
  %s3 = inlined_call_operand.vmem [shape: bf16[8,64], index: 3, kind: input, shape index: {}]
  %s4 = inlined_call_operand.vmem [shape: f32[8,1], index: 4, kind: input, shape index: {}]
  %s5 = inlined_call_operand.hbm [shape: f32[8,256], index: 5, kind: output, shape index: {}]
  %s6 = sld [smem:[#allocation0]]
  $region53: #{tpu_custom_call.1} parent=0
    _
  %s8 = ssub.s32 1, %s6
  %s9 = scalar_select 0, %s8, %s6
  $region1: #{tpu_custom_call.1} parent=0
    #allocation2 [shape = 'u8[8192]{0}', space=vmem, size = 0x2000, scoped, tag = 'output window, operand 0']
    #allocation3 [shape = 's32[2]{0}', space=sflag, size = 0x8, scoped, tag = 'scoped memory for tpu_custom_call.1']
    %10 = vsyncpa [#allocation3], 0
    %s11 = scalar_lea.sflag [#allocation3], 1
    %12 = vsyncpa %s11, 0
    loop: start=0, step=1, limit=4
    $region2: #{tpu_custom_call.1} parent=1 // loop_pre_header
      _
    $region3: #{tpu_custom_call.1} parent=1 // loop_header
      %s14 = sphi 0, %s18
      %p15 = scmp.ge.s32.totalorder %s14, 4
      %s24 = sphi 0, %s26
      %s27 = sphi 0, %s24
      %s28 = sphi 0, %s27
      %s44 = sphi 0, %s28
      %s48 = sphi 0, %s48
      %s50 = sphi 0, %s48
      %s51 = sphi 0, %s50
      %s65 = sphi 0, %s51
      %s69 = sphi 0, %s69
      %s71 = sphi 0, %s69
      %s72 = sphi 0, %s71
      %s86 = sphi 0, %s72
      %s90 = sphi 0, %s90
      %s92 = sphi 0, %s90
      %s93 = sphi 0, %s92
      %s107 = sphi 0, %s93
      %s111 = sphi 0, %s111
      %s113 = sphi 0, %s111
      %s114 = sphi 0, %s113
      %s128 = sphi 0, %s114
      %s134 = sphi 0, %s136
      %s137 = sphi 0, %s134
      %s138 = sphi 0, %s137
      %s154 = sphi 0, %s138
    $region4: #{tpu_custom_call.1} parent=1 // loop_header_branch
      %17 = sbr.rel (%p15) target = $region8
    $region5: #{tpu_custom_call.1} parent=1 // loop_body
      %s19 = ssub.s32 %s14, 1
      %s20 = ssub.s32 %s14, 2
      %s21 = sadd.s32 %s14, 1
      %s22 = ssub.s32 %s14, %s21
      %p23 = scmp.eq.s32.totalorder %s22, 0
      %s25 = sadd.s32 %s24, 1
      %s26 = scalar_select %p23, %s24, %s25
      %p29 = pneg %p23
      %p30 = scmp.eq.s32.totalorder %s14, 1
      %p31 = por %p29, %p30
      %p32 = scmp.ne.s32.totalorder %s24, %s27
      %p33 = scmp.eq.s32.totalorder %s14, 0
      %p34 = por %p32, %p33
      %p35 = scmp.ne.s32.totalorder %s24, %s27
      %p36 = scmp.eq.s32.totalorder %s19, 1
      %p37 = por %p35, %p36
      %p38 = scmp.ne.s32.totalorder %s27, %s28
      %p39 = scmp.eq.s32.totalorder %s19, 0
      %p40 = por %p38, %p39
      %p41 = scmp.ne.s32.totalorder %s27, %s28
      %p42 = scmp.eq.s32.totalorder %s20, 1
      %p43 = por %p41, %p42
      %p45 = scmp.ne.s32.totalorder %s28, %s44
      %p46 = scmp.eq.s32.totalorder %s20, 0
      %p47 = por %p45, %p46
      %s49 = sadd.s32 %s48, 1
      %p52 = scmp.eq.s32.totalorder %s14, 1
      %p53 = scmp.ne.s32.totalorder %s48, %s50
      %p54 = scmp.eq.s32.totalorder %s14, 0
      %p55 = por %p53, %p54
      %p56 = scmp.ne.s32.totalorder %s48, %s50
      %p57 = scmp.eq.s32.totalorder %s19, 1
      %p58 = por %p56, %p57
      %p59 = scmp.ne.s32.totalorder %s50, %s51
      %p60 = scmp.eq.s32.totalorder %s19, 0
      %p61 = por %p59, %p60
      %p62 = scmp.ne.s32.totalorder %s50, %s51
      %p63 = scmp.eq.s32.totalorder %s20, 1
      %p64 = por %p62, %p63
      %p66 = scmp.ne.s32.totalorder %s51, %s65
      %p67 = scmp.eq.s32.totalorder %s20, 0
      %p68 = por %p66, %p67
      %s70 = sadd.s32 %s69, 1
      %p73 = scmp.eq.s32.totalorder %s14, 1
      %p74 = scmp.ne.s32.totalorder %s69, %s71
      %p75 = scmp.eq.s32.totalorder %s14, 0
      %p76 = por %p74, %p75
      %p77 = scmp.ne.s32.totalorder %s69, %s71
      %p78 = scmp.eq.s32.totalorder %s19, 1
      %p79 = por %p77, %p78
      %p80 = scmp.ne.s32.totalorder %s71, %s72
      %p81 = scmp.eq.s32.totalorder %s19, 0
      %p82 = por %p80, %p81
      %p83 = scmp.ne.s32.totalorder %s71, %s72
      %p84 = scmp.eq.s32.totalorder %s20, 1
      %p85 = por %p83, %p84
      %p87 = scmp.ne.s32.totalorder %s72, %s86
      %p88 = scmp.eq.s32.totalorder %s20, 0
      %p89 = por %p87, %p88
      %s91 = sadd.s32 %s90, 1
      %p94 = scmp.eq.s32.totalorder %s14, 1
      %p95 = scmp.ne.s32.totalorder %s90, %s92
      %p96 = scmp.eq.s32.totalorder %s14, 0
      %p97 = por %p95, %p96
      %p98 = scmp.ne.s32.totalorder %s90, %s92
      %p99 = scmp.eq.s32.totalorder %s19, 1
      %p100 = por %p98, %p99
      %p101 = scmp.ne.s32.totalorder %s92, %s93
      %p102 = scmp.eq.s32.totalorder %s19, 0
      %p103 = por %p101, %p102
      %p104 = scmp.ne.s32.totalorder %s92, %s93
      %p105 = scmp.eq.s32.totalorder %s20, 1
      %p106 = por %p104, %p105
      %p108 = scmp.ne.s32.totalorder %s93, %s107
      %p109 = scmp.eq.s32.totalorder %s20, 0
      %p110 = por %p108, %p109
      %s112 = sadd.s32 %s111, 1
      %p115 = scmp.eq.s32.totalorder %s14, 1
      %p116 = scmp.ne.s32.totalorder %s111, %s113
      %p117 = scmp.eq.s32.totalorder %s14, 0
      %p118 = por %p116, %p117
      %p119 = scmp.ne.s32.totalorder %s111, %s113
      %p120 = scmp.eq.s32.totalorder %s19, 1
      %p121 = por %p119, %p120
      %p122 = scmp.ne.s32.totalorder %s113, %s114
      %p123 = scmp.eq.s32.totalorder %s19, 0
      %p124 = por %p122, %p123
      %p125 = scmp.ne.s32.totalorder %s113, %s114
      %p126 = scmp.eq.s32.totalorder %s20, 1
      %p127 = por %p125, %p126
      %p129 = scmp.ne.s32.totalorder %s114, %s128
      %p130 = scmp.eq.s32.totalorder %s20, 0
      %p131 = por %p129, %p130
      %s132 = ssub.s32 %s14, %s21
      %p133 = scmp.eq.s32.totalorder %s132, 0
      %s135 = sadd.s32 %s134, 1
      %s136 = scalar_select %p133, %s134, %s135
      %p139 = pneg %p133
      %p140 = scmp.eq.s32.totalorder %s14, 1
      %p141 = por %p139, %p140
      %p142 = scmp.ne.s32.totalorder %s134, %s137
      %p143 = scmp.eq.s32.totalorder %s14, 0
      %p144 = por %p142, %p143
      %p145 = scmp.ne.s32.totalorder %s134, %s137
      %p146 = scmp.eq.s32.totalorder %s19, 1
      %p147 = por %p145, %p146
      %p148 = scmp.ne.s32.totalorder %s137, %s138
      %p149 = scmp.eq.s32.totalorder %s19, 0
      %p150 = por %p148, %p149
      %p151 = scmp.ne.s32.totalorder %s137, %s138
      %p152 = scmp.eq.s32.totalorder %s20, 1
      %p153 = por %p151, %p152
      %p155 = scmp.ne.s32.totalorder %s138, %s154
      %p156 = scmp.eq.s32.totalorder %s20, 0
      %p157 = por %p155, %p156
      %p158 = scmp.le.s32.totalorder 1, %s14
      %p159 = scmp.lt.s32.totalorder %s14, 3
      %p160 = pnand %p158, %p159
      %p161 = pneg %p160
      // Predicated region
      $region9: #{tpu_custom_call.1} parent=5 // pred_check
        _
      $region10: #{tpu_custom_call.1} parent=5 // pred_check_branch
        %163 = sbr.rel (%p160) target = $region12
      $region11: #{tpu_custom_call.1} parent=5 // pred_region
        %s164 = ssub.s32 %s14, 1
        // Predicated region
        $region13: #{tpu_custom_call.1} parent=11 // pred_check
          %p165 = pneg %p61
        $region14: #{tpu_custom_call.1} parent=11 // pred_check_branch
          %167 = sbr.rel (%p165) target = $region16
        $region15: #{tpu_custom_call.1} parent=11 // pred_region
          _
        $region16: #{tpu_custom_call.1} parent=11 // pred_fallthru
          _
        // Predicated region
        $region17: #{tpu_custom_call.1} parent=11 // pred_check
          %p168 = pneg %p82
        $region18: #{tpu_custom_call.1} parent=11 // pred_check_branch
          %170 = sbr.rel (%p168) target = $region20
        $region19: #{tpu_custom_call.1} parent=11 // pred_region
          _
        $region20: #{tpu_custom_call.1} parent=11 // pred_fallthru
          _
        // Predicated region
        $region21: #{tpu_custom_call.1} parent=11 // pred_check
          %p171 = pneg %p103
        $region22: #{tpu_custom_call.1} parent=11 // pred_check_branch
          %173 = sbr.rel (%p171) target = $region24
        $region23: #{tpu_custom_call.1} parent=11 // pred_region
          _
        $region24: #{tpu_custom_call.1} parent=11 // pred_fallthru
          _
        // Predicated region
        $region25: #{tpu_custom_call.1} parent=11 // pred_check
          %p174 = pneg %p124
        $region26: #{tpu_custom_call.1} parent=11 // pred_check_branch
          %176 = sbr.rel (%p174) target = $region28
        $region27: #{tpu_custom_call.1} parent=11 // pred_region
          _
        $region28: #{tpu_custom_call.1} parent=11 // pred_fallthru
          _
      $region12: #{tpu_custom_call.1} parent=5 // pred_fallthru
        _
      %p177 = scmp.lt.s32.totalorder %s14, 2
      // Predicated region
      $region29: #{tpu_custom_call.1} parent=5 // pred_check
        %p178 = pneg %p177
      $region30: #{tpu_custom_call.1} parent=5 // pred_check_branch
        %180 = sbr.rel (%p178) target = $region32
      $region31: #{tpu_custom_call.1} parent=5 // pred_region
        // Predicated region
        $region33: #{tpu_custom_call.1} parent=31 // pred_check
          %p181 = pneg %p34
        $region34: #{tpu_custom_call.1} parent=31 // pred_check_branch
          %183 = sbr.rel (%p181) target = $region36
        $region35: #{tpu_custom_call.1} parent=31 // pred_region
          %p184 = scmp.lt.s32.totalorder %s14, 1
          %s185 = scalar_select %p184, %s14, 1
          %s186 = smul.addr %s185, 4
          %s187 = scalar_lea.vmem %s0, %s186
        $region36: #{tpu_custom_call.1} parent=31 // pred_fallthru
          _
      $region32: #{tpu_custom_call.1} parent=5 // pred_fallthru
        _
      %p188 = scmp.le.s32.totalorder 1, %s14
      %p189 = scmp.lt.s32.totalorder %s14, 3
      %p190 = pnand %p188, %p189
      %p191 = pneg %p190
      // Predicated region
      $region37: #{tpu_custom_call.1} parent=5 // pred_check
        _
      $region38: #{tpu_custom_call.1} parent=5 // pred_check_branch
        %193 = sbr.rel (%p190) target = $region40
      $region39: #{tpu_custom_call.1} parent=5 // pred_region
        %s194 = ssub.s32 %s14, 1
        %p195 = scmp.lt.s32.totalorder %s19, 1
        %s196 = scalar_select %p195, %s19, 1
        %s197 = smul.addr %s196, 4
        %s198 = scalar_lea.vmem %s0, %s197
        %p199 = pneg %p40
        %p200 = pneg %p37
        %p201 = pneg %p61
        %p202 = pneg %p58
        %p203 = pneg %p82
        %p204 = pneg %p79
        %p205 = pneg %p103
        %p206 = pneg %p100
        %p207 = pneg %p124
        %p208 = pneg %p121
        %p209 = pneg %p150
        %p210 = pneg %p147
        %s211 = sand.u32 %s137, 1
        %s212 = scalar_lea.sflag [#allocation3], %s211
        %s213 = sand.u32 %s137, 1
        %s214 = smul.addr %s213, 8
        %s215 = scalar_lea.vmem [#allocation2], %s214
        %p216 = scmp.lt.s32.totalorder %s19, 1
        %s217 = scalar_select %p216, %s19, 1
        %s218 = smul.addr %s217, 4
        %s219 = scalar_lea.vmem %s0, %s218
        %v221 = vld [vmem:[%s1] sm:$0xf]
        %v222 = vld [vmem:[%s1 + $0x4] sm:$0xf]
        %v223 = vld [vmem:[%s1 + $0x8] sm:$0xf]
        %v224 = vld [vmem:[%s1 + $0xc] sm:$0xf]
        %v225 = vld [vmem:[%s1 + $0x10] sm:$0xf]
        %v226 = vld [vmem:[%s1 + $0x14] sm:$0xf]
        %v227 = vld [vmem:[%s1 + $0x18] sm:$0xf]
        %v228 = vld [vmem:[%s1 + $0x1c] sm:$0xf]
        %v229 = vld [vmem:[%s219] sm:$0xf]
        %v230 = vld [vmem:[%s2] sm:$0xff]
        %v231 = vld [vmem:[%s2 + $0x8] sm:$0xff]
        %v232 = vld [vmem:[%s2 + $0x10] sm:$0xff]
        %v233 = vld [vmem:[%s2 + $0x18] sm:$0xff]
        %v234 = vld [vmem:[%s2 + $0x20] sm:$0xff]
        %v235 = vld [vmem:[%s2 + $0x28] sm:$0xff]
        %v236 = vld [vmem:[%s2 + $0x30] sm:$0xff]
        %v237 = vld [vmem:[%s2 + $0x38] sm:$0xff]
        %239 = vset.pattern.permute.xlu0 0
        %240 = vperm.xlu0 %239, %v230
        %v241 = vpop.permute.xlu0 %240
        %244 = vset.pattern.permute.xlu0 0
        %245 = vperm.xlu0 %244, %v231
        %v246 = vpop.permute.xlu0 %245
        %249 = vset.pattern.permute.xlu0 0
        %250 = vperm.xlu0 %249, %v232
        %v251 = vpop.permute.xlu0 %250
        %254 = vset.pattern.permute.xlu0 0
        %255 = vperm.xlu0 %254, %v233
        %v256 = vpop.permute.xlu0 %255
        %259 = vset.pattern.permute.xlu0 0
        %260 = vperm.xlu0 %259, %v234
        %v261 = vpop.permute.xlu0 %260
        %264 = vset.pattern.permute.xlu0 0
        %265 = vperm.xlu0 %264, %v235
        %v266 = vpop.permute.xlu0 %265
        %269 = vset.pattern.permute.xlu0 0
        %270 = vperm.xlu0 %269, %v236
        %v271 = vpop.permute.xlu0 %270
        %274 = vset.pattern.permute.xlu0 0
        %275 = vperm.xlu0 %274, %v237
        %v276 = vpop.permute.xlu0 %275
        %v286 = vunpack.c.l.b16 %v221
        %v287 = vunpack.c.l.b16 %v222
        %v288 = vunpack.c.l.b16 %v223
        %v289 = vunpack.c.l.b16 %v224
        %v290 = vunpack.c.l.b16 %v225
        %v291 = vunpack.c.l.b16 %v226
        %v292 = vunpack.c.l.b16 %v227
        %v293 = vunpack.c.l.b16 %v228
        %v294 = vpack.c.b16 %v287, %v286
        %v295 = vpack.c.b16 %v289, %v288
        %v296 = vpack.c.b16 %v291, %v290
        %v297 = vpack.c.b16 %v293, %v292
        %vm298 = vcmask 64512
        %v300 = vsel %vm298, %v294, 0
        %v303 = vsel %vm298, %v295, 0
        %v306 = vsel %vm298, %v296, 0
        %v309 = vsel %vm298, %v297, 0
        %vm311 = vcmask 1043456
        %v313 = vsel %vm311, %v229, 0
        %315 = vmatpush.bf16.msra.mxu0 0
        %316 = vmatpush.bf16.msra.mxu0 0
        %317 = vmatpush.bf16.msra.mxu0 0
        %318 = vmatpush.bf16.msra.mxu0 0
        %319 = vmatpush.bf16.msra.mxu0 0
        %320 = vmatpush.bf16.msra.mxu0 0
        %321 = vmatpush.bf16.msra.mxu0 0
        %322 = vmatpush.bf16.msra.mxu0 %v313
        %323 = vmatmul.bf16.gmra.mxu0 %v300
        %v324 = vpop.f32.mrf.mxu0
        %v325 = vadd.f32 %v241, %v324
        %v326 = vpop.f32.mrf.mxu0
        %v327 = vadd.f32 %v246, %v326
        %328 = vmatmul.bf16.gmra.mxu0 %v303
        %v329 = vpop.f32.mrf.mxu0
        %v330 = vadd.f32 %v251, %v329
        %v331 = vpop.f32.mrf.mxu0
        %v332 = vadd.f32 %v256, %v331
        %333 = vmatmul.bf16.gmra.mxu0 %v306
        %v334 = vpop.f32.mrf.mxu0
        %v335 = vadd.f32 %v261, %v334
        %v336 = vpop.f32.mrf.mxu0
        %v337 = vadd.f32 %v266, %v336
        %338 = vmatmul.bf16.gmra.mxu0 %v309
        %v339 = vpop.f32.mrf.mxu0
        %v340 = vadd.f32 %v271, %v339
        %v341 = vpop.f32.mrf.mxu0
        %v342 = vadd.f32 %v276, %v341
        %343 = vdwg.mxu0
        %v344 = vmax.f32 %v325, 0.0
        %v345 = vmax.f32 %v327, 0.0
        %v346 = vmax.f32 %v330, 0.0
        %v347 = vmax.f32 %v332, 0.0
        %v348 = vmax.f32 %v335, 0.0
        %v349 = vmax.f32 %v337, 0.0
        %v350 = vmax.f32 %v340, 0.0
        %v351 = vmax.f32 %v342, 0.0
        %v352 = vld [vmem:[%s3] sm:$0xf]
        %v353 = vpack.c.bf16 %v345, %v344
        %v354 = vpack.c.bf16 %v347, %v346
        %v355 = vpack.c.bf16 %v349, %v348
        %v356 = vpack.c.bf16 %v351, %v350
        %v357 = vld [vmem:[%s4] sm:$0xff]
        %359 = vset.pattern.permute.xlu0 0
        %360 = vperm.xlu0 %359, %v357
        %v361 = vpop.permute.xlu0 %360
        %vm363 = vcmask 523264
        %v365 = vsel %vm363, %v352, 0
        %367 = vmatpush.bf16.msra.mxu0 0
        %368 = vmatpush.bf16.msra.mxu0 0
        %369 = vmatpush.bf16.msra.mxu0 0
        %370 = vmatpush.bf16.msra.mxu0 0
        %371 = vmatpush.bf16.msra.mxu0 %v356
        %372 = vmatpush.bf16.msra.mxu0 %v355
        %373 = vmatpush.bf16.msra.mxu0 %v354
        %374 = vmatpush.bf16.msra.mxu0 %v353
        %375 = vmatmul.bf16.gmra.mxu0 %v365
        %v376 = vpop.f32.mrf.mxu0
        %v377 = vadd.f32 %v361, %v376
        %v378 = vpop.f32.mrf.mxu0
        %379 = vdwg.mxu0
        %380 = vst [vmem:[%s215] sm:$0xff] %v377
        %s381 = sand.u32 %s137, 1
        %s382 = scalar_lea.sflag [#allocation3], %s381
        %s383 = sand.u32 %s137, 1
        %s384 = smul.addr %s383, 8
        %s385 = scalar_lea.vmem [#allocation2], %s384
        // Predicated region
        $region41: #{tpu_custom_call.1} parent=39 // pred_check
          %p386 = pneg %p147
        $region42: #{tpu_custom_call.1} parent=39 // pred_check_branch
          %388 = sbr.rel (%p386) target = $region44
        $region43: #{tpu_custom_call.1} parent=39 // pred_region
          %390 = vsyncadd %s382, 0
          %s391 = smul.addr %s19, 8
          %s392 = scalar_lea.hbm %s5, %s391
          %s394 = sshll.u32 %s385, 4
          %s395 = int_to_ptr.vmem [resolvable:$true] %s394
          %s396 = sshll.u32 %s392, 4
          %s397 = int_to_ptr.hbm [resolvable:$true] %s396
          %399 = dma.vmem_to_hbm [thread:$0]  %s395, 128, %s397, %s382
        $region44: #{tpu_custom_call.1} parent=39 // pred_fallthru
          _
      $region40: #{tpu_custom_call.1} parent=5 // pred_fallthru
        _
      %p400 = scmp.le.s32.totalorder 2, %s14
      // Predicated region
      $region45: #{tpu_custom_call.1} parent=5 // pred_check
        %p401 = pneg %p400
      $region46: #{tpu_custom_call.1} parent=5 // pred_check_branch
        %403 = sbr.rel (%p401) target = $region48
      $region47: #{tpu_custom_call.1} parent=5 // pred_region
        %s404 = ssub.s32 %s14, 2
        // Predicated region
        $region49: #{tpu_custom_call.1} parent=47 // pred_check
          %p405 = pneg %p153
        $region50: #{tpu_custom_call.1} parent=47 // pred_check_branch
          %407 = sbr.rel (%p405) target = $region52
        $region51: #{tpu_custom_call.1} parent=47 // pred_region
          %s408 = sand.u32 %s138, 1
          %s409 = scalar_lea.sflag [#allocation3], %s408
          %s410 = sand.u32 %s138, 1
          %s411 = smul.addr %s410, 8
          %s412 = scalar_lea.vmem [#allocation2], %s411
          %414 = dma.done %s409, 128
        $region52: #{tpu_custom_call.1} parent=47 // pred_fallthru
          _
      $region48: #{tpu_custom_call.1} parent=5 // pred_fallthru
        _
    $region6: #{tpu_custom_call.1} parent=1 // loop_footer
      %s18 = sadd.s32 1, %s14
    $region7: #{tpu_custom_call.1} parent=1 // loop_footer_branch
      %13 = sbr.rel target = $region3
    $region8: #{tpu_custom_call.1} parent=1 // loop_exit
      _
    %415 = vsyncpa [#allocation3], 1
    %s416 = scalar_lea.sflag [#allocation3], 1
    %417 = vsyncpa %s416, 1

</llo_original>
